<compile_context>
chip_gen: v7x
topology: tpu7x:2x2x1
jax: 0.10.0
libtpu: 0.0.40
codegen_flags: <defaults>
</compile_context>

<pallas_src>
import itertools

import numpy as np
import jax
import jax.numpy as jnp
from jax.experimental import pallas as pl
from jax.experimental.pallas import tpu as pltpu
from jax.scipy.linalg import block_diag


# ----------------------------------------------------------------------------
# Fused kernel: K-fused dueling MLP (V_nn + A_nn) + Moebius-Choquet epilogue.
# All edge / subset structure is static Python and baked into the kernel body.
# ----------------------------------------------------------------------------
def make_critic_kernel(edge_plan, node_nums, out_num):
    """edge_plan: list of (self_node, nb_nodes_tuple, subsets_tuple, mobius_offset)."""

    def kernel(xa_ref, w1_ref, b1_ref, w2_ref, b2_ref, ep_ref, out_ref):
        xa = xa_ref[...]                                   # (bt, 2*N*H), bf16

        # Layer 1 (K-fused, K = 2*N*H = 256): one bf16 matmul covers
        # obs->V, obs->A and act->A (act->V quadrant of w1 is zero).
        h1 = (jnp.dot(xa, w1_ref[...], preferred_element_type=jnp.float32)
              + b1_ref[...])
        h1 = jnp.maximum(h1, 0.0).astype(jnp.bfloat16)

        # Layer 2: Q = V + A in one matmul (h1 = [hv | ha], w2 = [[Wv2],[Wa2]]).
        q = (jnp.dot(h1, w2_ref[...], preferred_element_type=jnp.float32)
             + b2_ref[...])                                # (bt, N*O), f32

        # Per-node Q slices, extracted exactly once.
        nq = [q[:, n * out_num:(n + 1) * out_num] for n in range(node_nums)]

        # Moebius-Choquet mins over static subset structure.  The Moebius
        # weights, the self-Q term and the mean over out_num are all folded
        # into one tiny epilogue matmul against ep_ref.
        blocks = [q]
        for _self_node, nb_nodes, subsets, _off in edge_plan:
            for subset in subsets:
                mn = nq[nb_nodes[subset[0]]]
                for i in subset[1:]:
                    mn = jnp.minimum(mn, nq[nb_nodes[i]])
                blocks.append(mn)
        z = jnp.concatenate(blocks, axis=1)                # (bt, N*O + T*O), f32

        # Single matmul + single dense store for the whole epilogue.
        out_ref[...] = jnp.dot(z, ep_ref[...], preferred_element_type=jnp.float32)

    return kernel


# ----------------------------------------------------------------------------
# Wrapper-side parameter packing (done once, outside the hot path).
# ----------------------------------------------------------------------------
def pack_params(params):
    """Block-diagonalize per-node weights, K-fuse obs||act, cast to bf16."""
    N, H, _ = params["wv1"].shape
    O = params["wv2"].shape[-1]
    NH = N * H

    wv1 = block_diag(*[params["wv1"][n] for n in range(N)])        # (NH, NH)
    wa1o = block_diag(*[params["wa1_obs"][n] for n in range(N)])   # (NH, NH)
    wa1a = block_diag(*[params["wa1_act"][n] for n in range(N)])   # (NH, NH)
    wv2 = block_diag(*[params["wv2"][n] for n in range(N)])        # (NH, N*O)
    wa2 = block_diag(*[params["wa2"][n] for n in range(N)])        # (NH, N*O)

    # Layer-1 RHS (K-fused): rows = [obs_flat rows | act_flat rows],
    # cols = [V-half | A-half].  Only the act->V quadrant is zero.
    w1 = jnp.concatenate(
        [jnp.concatenate([wv1, wa1o], axis=1),
         jnp.concatenate([jnp.zeros((NH, NH), jnp.float32), wa1a], axis=1)],
        axis=0).astype(jnp.bfloat16)                                # (2NH, 2NH)
    b1 = jnp.concatenate([params["bv1"].reshape(1, NH),
                          params["ba1"].reshape(1, NH)], axis=1)    # (1, 2NH) f32

    # Layer-2 RHS: stacking rows sums V and A contributions in one matmul.
    w2 = jnp.concatenate([wv2, wa2], axis=0).astype(jnp.bfloat16)   # (2NH, N*O)
    b2 = (params["bv2"].reshape(1, N * O)
          + params["ba2"].reshape(1, N * O))                        # (1, N*O) f32

    return {"w1": w1, "b1": b1, "w2": w2, "b2": b2}


def build_edge_plan(local_edges, chi_mobius, chi_subsets):
    """Static edge/subset plan + flat head-averaged Moebius coefficient vector."""
    edge_plan, mob_parts, off = [], [], 0
    for edge, mob, subsets in zip(local_edges, chi_mobius, chi_subsets):
        self_node = int(edge[0, 0])
        nb_nodes = tuple(int(v) for v in edge[0, 1:])
        edge_plan.append((self_node, nb_nodes,
                          tuple(tuple(s) for s in subsets), off))
        off += len(subsets)
        mob_parts.append(jnp.mean(mob, axis=0))          # pre-average over heads
    return edge_plan, jnp.concatenate(mob_parts, axis=0).astype(jnp.float32)


def build_epilogue_matrix(edge_plan, mobius_flat, N, O, num_edges):
    """(N*O + T*O, E) matrix folding self-Q, Moebius weights and the 1/O mean."""
    m = np.asarray(mobius_flat)
    T = m.shape[0]
    ep = np.zeros((N * O + T * O, num_edges), dtype=np.float32)
    inv_o = 1.0 / float(O)
    for e, (self_node, _nb, subsets, off) in enumerate(edge_plan):
        ep[self_node * O:(self_node + 1) * O, e] = inv_o
        for t in range(len(subsets)):
            g = off + t
            ep[N * O + g * O:N * O + (g + 1) * O, e] = m[g] * inv_o
    return jnp.asarray(ep)


def build_critic_forward(edge_plan, B, N, H, O, num_edges, ep_rows):
    kernel = make_critic_kernel(edge_plan, N, O)
    NH2, NO = 2 * N * H, N * O

    # Batch is the only grid axis; at small B this is a single monolithic step.
    bt = B if B <= 128 else 128
    assert B % bt == 0, "batch must be a multiple of the batch tile"
    grid = (B // bt,)

    call = pl.pallas_call(
        kernel,
        out_shape=jax.ShapeDtypeStruct((B, num_edges), jnp.float32),
        grid=grid,
        in_specs=[
            pl.BlockSpec((bt, NH2), lambda i: (i, 0)),        # xa (obs||act)
            pl.BlockSpec((NH2, NH2), lambda i: (0, 0)),       # w1 (resident)
            pl.BlockSpec((1, NH2), lambda i: (0, 0)),         # b1
            pl.BlockSpec((NH2, NO), lambda i: (0, 0)),        # w2
            pl.BlockSpec((1, NO), lambda i: (0, 0)),          # b2
            pl.BlockSpec((ep_rows, num_edges), lambda i: (0, 0)),  # epilogue mat
        ],
        out_specs=pl.BlockSpec((bt, num_edges), lambda i: (i, 0)),
        compiler_params=pltpu.CompilerParams(
            dimension_semantics=("parallel",)),               # v7x megacore
    )

    @jax.jit
    def forward(observation, action, packed, epilogue):
        # Free contiguous reshapes + one lane-concat; bf16 halves LHS DMA too.
        xa = jnp.concatenate([observation.reshape(B, N * H),
                              action.reshape(B, N * H)],
                             axis=1).astype(jnp.bfloat16)
        return call(xa, packed["w1"], packed["b1"],
                    packed["w2"], packed["b2"], epilogue)

    return forward


# ----------------------------------------------------------------------------
# Pure-JAX reference (per-node einsums; correctness check only).
# ----------------------------------------------------------------------------
def critic_reference(observation, action, local_edges, params, chi_mobius,
                     chi_subsets):
    def mmlp(x, w, b, relu):
        y = jnp.einsum("bni,nio->bno", x, w) + b[None, :, 0, :]
        return jnp.maximum(y, 0.0) if relu else y

    v = mmlp(mmlp(observation, params["wv1"], params["bv1"], True),
             params["wv2"], params["bv2"], False)
    xa = jnp.concatenate([observation, action], axis=-1)
    wa1 = jnp.concatenate([params["wa1_obs"], params["wa1_act"]], axis=1)
    adv = mmlp(mmlp(xa, wa1, params["ba1"], True),
               params["wa2"], params["ba2"], False)
    Q = v + adv

    outs = []
    for edge, mob, subsets in zip(local_edges, chi_mobius, chi_subsets):
        q_nb = Q[:, np.asarray(edge[0, 1:]), :]
        q_self = Q[:, int(edge[0, 0]), :]
        m_mean = jnp.mean(mob, axis=0)
        chi = jnp.zeros_like(q_self)
        for t, subset in enumerate(subsets):
            mn = q_nb[:, subset[0], :]
            for i in subset[1:]:
                mn = jnp.minimum(mn, q_nb[:, i, :])
            chi = chi + m_mean[t] * mn
        outs.append(jnp.mean(chi + q_self, axis=1))
    return jnp.stack(outs, axis=1)


# ----------------------------------------------------------------------------
def all_nonempty_subsets(n):
    subs = []
    for k in range(1, n + 1):
        subs.extend(itertools.combinations(range(n), k))
    return subs


if __name__ == "__main__":
    B, N, H, O, heads = 2, 4, 32, 4, 3           # batch, node_nums, hidden, output_nums
    neighbor_nums = [3, 3, 4, 3]                 # per-node neighborhood size (incl. self)

    key = jax.random.PRNGKey(0)
    ks = list(jax.random.split(key, 16))

    def init(k, shape, fan_in):
        return (jax.random.normal(k, shape, jnp.float32) / np.sqrt(fan_in)).astype(jnp.float32)

    params = {
        "wv1":     init(ks[0], (N, H, H), H),
        "bv1":     init(ks[1], (N, 1, H), H),
        "wv2":     init(ks[2], (N, H, O), H),
        "bv2":     init(ks[3], (N, 1, O), H),
        "wa1_obs": init(ks[4], (N, H, H), 2 * H),
        "wa1_act": init(ks[5], (N, H, H), 2 * H),
        "ba1":     init(ks[6], (N, 1, H), 2 * H),
        "wa2":     init(ks[7], (N, H, O), H),
        "ba2":     init(ks[8], (N, 1, O), H),
    }

    observation = jax.random.normal(ks[9], (B, N, H), jnp.float32)
    action = jax.random.normal(ks[10], (B, N, H), jnp.float32)

    # local_edges[i]: row 0 = [self_node, neighbor nodes...]  (row 1 unused here)
    local_edges = [
        np.array([[0, 1, 2],    [0, 0, 0]],    dtype=np.int32),
        np.array([[1, 2, 3],    [0, 0, 0]],    dtype=np.int32),
        np.array([[2, 0, 1, 3], [0, 0, 0, 0]], dtype=np.int32),
        np.array([[3, 0, 2],    [0, 0, 0]],    dtype=np.int32),
    ]
    assert [e.shape[1] for e in local_edges] == neighbor_nums

    chi_subsets, chi_mobius = [], []
    for i, nns in enumerate(neighbor_nums):
        n_nb = nns - 1
        subs = all_nonempty_subsets(n_nb)
        chi_subsets.append(subs)
        chi_mobius.append(
            0.5 * jax.random.normal(jax.random.fold_in(key, 100 + i),
                                    (heads, len(subs)), jnp.float32))

    # --- pack once (wrapper-side), run the single fused kernel -------------
    packed = pack_params(params)
    edge_plan, mobius_flat = build_edge_plan(local_edges, chi_mobius, chi_subsets)
    E = len(local_edges)
    epilogue = build_epilogue_matrix(edge_plan, mobius_flat, N, O, E)
    critic_forward = build_critic_forward(edge_plan, B, N, H, O, E,
                                          epilogue.shape[0])

    out = critic_forward(observation, action, packed, epilogue)
    out = jax.block_until_ready(out)

    ref = critic_reference(observation, action, local_edges, params,
                           chi_mobius, chi_subsets)
    # Tolerance reflects the bf16 MXU weight/activation path (f32 accumulation).
    np.testing.assert_allclose(np.asarray(out), np.asarray(ref),
                               rtol=3e-2, atol=3e-2)
    assert out.shape == (B, E)

    # --- batched-evaluation demo (perf feedback: fold many evals into one call,
    #     batch grid axis runs "parallel" across v7x's two TensorCores) -------
    BB = 256
    obs_b = jax.random.normal(ks[11], (BB, N, H), jnp.float32)
    act_b = jax.random.normal(ks[12], (BB, N, H), jnp.float32)
    critic_forward_big = build_critic_forward(edge_plan, BB, N, H, O, E,
                                              epilogue.shape[0])
    out_b = jax.block_until_ready(
        critic_forward_big(obs_b, act_b, packed, epilogue))
    ref_b = critic_reference(obs_b, act_b, local_edges, params,
                             chi_mobius, chi_subsets)
    np.testing.assert_allclose(np.asarray(out_b), np.asarray(ref_b),
                               rtol=3e-2, atol=3e-2)
    assert out_b.shape == (BB, E)

    print("KERNEL_OK")
</pallas_src>

<mosaic_0001>
module attributes {stable_mosaic.version = 11 : i64} {
  func.func @kernel(%arg0: i32, %arg1: memref<2x256xbf16, #tpu.memory_space<vmem>>, %arg2: memref<256x256xbf16, #tpu.memory_space<vmem>>, %arg3: memref<1x256xf32, #tpu.memory_space<vmem>>, %arg4: memref<256x16xbf16, #tpu.memory_space<vmem>>, %arg5: memref<1x16xf32, #tpu.memory_space<vmem>>, %arg6: memref<80x4xf32, #tpu.memory_space<vmem>>, %arg7: memref<2x4xf32, #tpu.memory_space<vmem>>) attributes {dimension_semantics = [#tpu.dimension_semantics<parallel>], iteration_bounds = array<i64: 1>, scalar_prefetch = 0 : i64, scratch_operands = 0 : i64, tpu.core_type = #tpu.core_type<tc>, window_params = [{transform_indices = @transform_0, window_bounds = array<i64: 2, 256>}, {pipeline_mode = #tpu.pipeline_mode<synchronous>, transform_indices = @transform_1, window_bounds = array<i64: 256, 256>}, {pipeline_mode = #tpu.pipeline_mode<synchronous>, transform_indices = @transform_2, window_bounds = array<i64: 1, 256>}, {pipeline_mode = #tpu.pipeline_mode<synchronous>, transform_indices = @transform_3, window_bounds = array<i64: 256, 16>}, {pipeline_mode = #tpu.pipeline_mode<synchronous>, transform_indices = @transform_4, window_bounds = array<i64: 1, 16>}, {pipeline_mode = #tpu.pipeline_mode<synchronous>, transform_indices = @transform_5, window_bounds = array<i64: 80, 4>}, {transform_indices = @transform_6, window_bounds = array<i64: 2, 4>}]} {
    %c0 = arith.constant 0 : index
    %c0_0 = arith.constant 0 : index
    %0 = vector.load %arg1[%c0, %c0_0] : memref<2x256xbf16, #tpu.memory_space<vmem>>, vector<2x256xbf16>
    %c0_1 = arith.constant 0 : index
    %c0_2 = arith.constant 0 : index
    %1 = vector.load %arg2[%c0_1, %c0_2] : memref<256x256xbf16, #tpu.memory_space<vmem>>, vector<256x256xbf16>
    %cst = arith.constant dense<0.000000e+00> : vector<2x256xf32>
    %2 = tpu.matmul %0, %1, %cst {dimension_numbers = #tpu.dot_dimension_numbers<[1], [0], [0], [1], [0, 0, 1, 1], [], []>} : vector<2x256xbf16>, vector<256x256xbf16>, vector<2x256xf32> -> vector<2x256xf32>
    %c0_3 = arith.constant 0 : index
    %c0_4 = arith.constant 0 : index
    %3 = vector.load %arg3[%c0_3, %c0_4] : memref<1x256xf32, #tpu.memory_space<vmem>>, vector<1x256xf32>
    %4 = vector.broadcast %3 : vector<1x256xf32> to vector<2x256xf32>
    %5 = arith.addf %2, %4 : vector<2x256xf32>
    %cst_5 = arith.constant 0.000000e+00 : f32
    %6 = vector.broadcast %cst_5 : f32 to vector<2x256xf32>
    %7 = arith.maximumf %5, %6 : vector<2x256xf32>
    %8 = arith.truncf %7 : vector<2x256xf32> to vector<2x256xbf16>
    %c0_6 = arith.constant 0 : index
    %c0_7 = arith.constant 0 : index
    %9 = vector.load %arg4[%c0_6, %c0_7] : memref<256x16xbf16, #tpu.memory_space<vmem>>, vector<256x16xbf16>
    %cst_8 = arith.constant dense<0.000000e+00> : vector<2x16xf32>
    %10 = tpu.matmul %8, %9, %cst_8 {dimension_numbers = #tpu.dot_dimension_numbers<[1], [0], [0], [1], [0, 0, 1, 1], [], []>} : vector<2x256xbf16>, vector<256x16xbf16>, vector<2x16xf32> -> vector<2x16xf32>
    %c0_9 = arith.constant 0 : index
    %c0_10 = arith.constant 0 : index
    %11 = vector.load %arg5[%c0_9, %c0_10] : memref<1x16xf32, #tpu.memory_space<vmem>>, vector<1x16xf32>
    %12 = vector.broadcast %11 : vector<1x16xf32> to vector<2x16xf32>
    %13 = arith.addf %10, %12 : vector<2x16xf32>
    %14 = vector.extract_strided_slice %13 {offsets = [0, 0], sizes = [2, 4], strides = [1, 1]} : vector<2x16xf32> to vector<2x4xf32>
    %15 = vector.extract_strided_slice %13 {offsets = [0, 4], sizes = [2, 4], strides = [1, 1]} : vector<2x16xf32> to vector<2x4xf32>
    %16 = vector.extract_strided_slice %13 {offsets = [0, 8], sizes = [2, 4], strides = [1, 1]} : vector<2x16xf32> to vector<2x4xf32>
    %17 = vector.extract_strided_slice %13 {offsets = [0, 12], sizes = [2, 4], strides = [1, 1]} : vector<2x16xf32> to vector<2x4xf32>
    %18 = arith.minimumf %15, %16 : vector<2x4xf32>
    %19 = arith.minimumf %16, %17 : vector<2x4xf32>
    %20 = arith.minimumf %14, %15 : vector<2x4xf32>
    %21 = arith.minimumf %14, %17 : vector<2x4xf32>
    %22 = arith.minimumf %15, %17 : vector<2x4xf32>
    %23 = arith.minimumf %14, %15 : vector<2x4xf32>
    %24 = arith.minimumf %23, %17 : vector<2x4xf32>
    %25 = arith.minimumf %14, %16 : vector<2x4xf32>
    %26 = tpu.concatenate %13, %15, %16, %18, %16, %17, %19, %14, %15, %17, %20, %21, %22, %24, %14, %16 in 1 : vector<2x16xf32>, vector<2x4xf32>, vector<2x4xf32>, vector<2x4xf32>, vector<2x4xf32>, vector<2x4xf32>, vector<2x4xf32>, vector<2x4xf32>, vector<2x4xf32>, vector<2x4xf32>, vector<2x4xf32>, vector<2x4xf32>, vector<2x4xf32>, vector<2x4xf32>, vector<2x4xf32>, vector<2x4xf32> -> vector<2x76xf32>
    %27 = tpu.concatenate %26, %25 in 1 : vector<2x76xf32>, vector<2x4xf32> -> vector<2x80xf32>
    %c0_11 = arith.constant 0 : index
    %c0_12 = arith.constant 0 : index
    %28 = vector.load %arg6[%c0_11, %c0_12] : memref<80x4xf32, #tpu.memory_space<vmem>>, vector<80x4xf32>
    %cst_13 = arith.constant dense<0.000000e+00> : vector<2x4xf32>
    %29 = tpu.matmul %27, %28, %cst_13 {dimension_numbers = #tpu.dot_dimension_numbers<[1], [0], [0], [1], [0, 0, 1, 1], [], []>} : vector<2x80xf32>, vector<80x4xf32>, vector<2x4xf32> -> vector<2x4xf32>
    %c0_14 = arith.constant 0 : index
    %c0_15 = arith.constant 0 : index
    %30 = vector.load %arg7[%c0_14, %c0_15] : memref<2x4xf32, #tpu.memory_space<vmem>>, vector<2x4xf32>
    tpu.vector_store %arg7[%c0_14, %c0_15], %29 {strides = array<i32>} : memref<2x4xf32, #tpu.memory_space<vmem>>, vector<2x4xf32>,
    return
  }
  func.func @transform_0(%arg0: i32) -> (i32, i32) {
    %c0_i32 = arith.constant 0 : i32
    %c0_i32_0 = arith.constant 0 : i32
    return %arg0, %c0_i32 : i32, i32
  }
  func.func @transform_1(%arg0: i32) -> (i32, i32) {
    %c0_i32 = arith.constant 0 : i32
    %c0_i32_0 = arith.constant 0 : i32
    %c0_i32_1 = arith.constant 0 : i32
    return %c0_i32, %c0_i32_0 : i32, i32
  }
  func.func @transform_2(%arg0: i32) -> (i32, i32) {
    %c0_i32 = arith.constant 0 : i32
    %c0_i32_0 = arith.constant 0 : i32
    %c0_i32_1 = arith.constant 0 : i32
    return %c0_i32, %c0_i32_0 : i32, i32
  }
  func.func @transform_3(%arg0: i32) -> (i32, i32) {
    %c0_i32 = arith.constant 0 : i32
    %c0_i32_0 = arith.constant 0 : i32
    %c0_i32_1 = arith.constant 0 : i32
    return %c0_i32, %c0_i32_0 : i32, i32
  }
  func.func @transform_4(%arg0: i32) -> (i32, i32) {
    %c0_i32 = arith.constant 0 : i32
    %c0_i32_0 = arith.constant 0 : i32
    %c0_i32_1 = arith.constant 0 : i32
    return %c0_i32, %c0_i32_0 : i32, i32
  }
  func.func @transform_5(%arg0: i32) -> (i32, i32) {
    %c0_i32 = arith.constant 0 : i32
    %c0_i32_0 = arith.constant 0 : i32
    %c0_i32_1 = arith.constant 0 : i32
    return %c0_i32, %c0_i32_0 : i32, i32
  }
  func.func @transform_6(%arg0: i32) -> (i32, i32) {
    %c0_i32 = arith.constant 0 : i32
    %c0_i32_0 = arith.constant 0 : i32
    return %arg0, %c0_i32 : i32, i32
  }
}

</mosaic_0001>

<llo_original>
// kernel: forward.1
$region0: #{forward.1}
  #allocation0 [shape = 'u32[]', space=smem, size = 0x4, offset = 0x4, fixed_abs, tag = 'smem constant byte address 0x4 - core index']
  #allocation1 [shape = 'u32[144,128]{1,0:T(1,128)}', space=vmem, size = 0x12000, scoped, tag = 'internal scratch']
  %s0 = inlined_call_operand.vmem [shape: bf16[2,256], index: 0, kind: input, shape index: {}]
  %s1 = inlined_call_operand.vmem [shape: bf16[256,256], index: 1, kind: input, shape index: {}]
  %s2 = inlined_call_operand.vmem [shape: f32[1,256], index: 2, kind: input, shape index: {}]
  %s3 = inlined_call_operand.vmem [shape: bf16[256,16], index: 3, kind: input, shape index: {}]
  %s4 = inlined_call_operand.vmem [shape: f32[1,16], index: 4, kind: input, shape index: {}]
  %s5 = inlined_call_operand.vmem [shape: f32[80,4], index: 5, kind: input, shape index: {}]
  %s6 = inlined_call_operand.hbm [shape: f32[2,4], index: 6, kind: output, shape index: {}]
  %s7 = sld [smem:[#allocation0]]
  $region34: #{forward.1} parent=0
    _
  %s9 = ssub.s32 1, %s7
  %s10 = scalar_select 0, %s9, %s7
  $region1: #{forward.1} parent=0
    #allocation2 [shape = 'u8[1024]{0}', space=vmem, size = 0x400, scoped, tag = 'output window, operand 0, single buffered']
    #allocation3 [shape = 's32[1]{0}', space=sflag, size = 0x4, scoped, tag = 'scoped memory for forward.1']
    %11 = vsyncpa [#allocation3], 0
    // Predicated region
    $region2: #{forward.1} parent=1 // pred_check
      _
    $region3: #{forward.1} parent=1 // pred_check_branch
      %13 = sbr.rel (0) target = $region5
    $region4: #{forward.1} parent=1 // pred_region
      _
    $region5: #{forward.1} parent=1 // pred_fallthru
      _
    // Predicated region
    $region6: #{forward.1} parent=1 // pred_check
      _
    $region7: #{forward.1} parent=1 // pred_check_branch
      %15 = sbr.rel (0) target = $region9
    $region8: #{forward.1} parent=1 // pred_region
      _
    $region9: #{forward.1} parent=1 // pred_fallthru
      _
    // Predicated region
    $region10: #{forward.1} parent=1 // pred_check
      _
    $region11: #{forward.1} parent=1 // pred_check_branch
      %17 = sbr.rel (0) target = $region13
    $region12: #{forward.1} parent=1 // pred_region
      _
    $region13: #{forward.1} parent=1 // pred_fallthru
      _
    // Predicated region
    $region14: #{forward.1} parent=1 // pred_check
      _
    $region15: #{forward.1} parent=1 // pred_check_branch
      %19 = sbr.rel (0) target = $region17
    $region16: #{forward.1} parent=1 // pred_region
      _
    $region17: #{forward.1} parent=1 // pred_fallthru
      _
    // Predicated region
    $region18: #{forward.1} parent=1 // pred_check
      _
    $region19: #{forward.1} parent=1 // pred_check_branch
      %21 = sbr.rel (0) target = $region21
    $region20: #{forward.1} parent=1 // pred_region
      _
    $region21: #{forward.1} parent=1 // pred_fallthru
      _
    // Predicated region
    $region22: #{forward.1} parent=1 // pred_check
      _
    $region23: #{forward.1} parent=1 // pred_check_branch
      %23 = sbr.rel (0) target = $region25
    $region24: #{forward.1} parent=1 // pred_region
      _
    $region25: #{forward.1} parent=1 // pred_fallthru
      _
    %v25 = vld [vmem:[%s0] sm:$0x3]
    %v26 = vld [vmem:[%s1] sm:$0xff]
    %v27 = vld [vmem:[%s1 + $0x8] sm:$0xff]
    %v28 = vld [vmem:[%s1 + $0x10] sm:$0xff]
    %v29 = vld [vmem:[%s1 + $0x18] sm:$0xff]
    %v30 = vld [vmem:[%s1 + $0x20] sm:$0xff]
    %v31 = vld [vmem:[%s1 + $0x28] sm:$0xff]
    %v32 = vld [vmem:[%s1 + $0x30] sm:$0xff]
    %v33 = vld [vmem:[%s1 + $0x38] sm:$0xff]
    %v34 = vld [vmem:[%s1 + $0x40] sm:$0xff]
    %v35 = vld [vmem:[%s1 + $0x48] sm:$0xff]
    %v36 = vld [vmem:[%s1 + $0x50] sm:$0xff]
    %v37 = vld [vmem:[%s1 + $0x58] sm:$0xff]
    %v38 = vld [vmem:[%s1 + $0x60] sm:$0xff]
    %v39 = vld [vmem:[%s1 + $0x68] sm:$0xff]
    %v40 = vld [vmem:[%s1 + $0x70] sm:$0xff]
    %v41 = vld [vmem:[%s1 + $0x78] sm:$0xff]
    %v42 = vld [vmem:[%s1 + $0x80] sm:$0xff]
    %v43 = vld [vmem:[%s1 + $0x88] sm:$0xff]
    %v44 = vld [vmem:[%s1 + $0x90] sm:$0xff]
    %v45 = vld [vmem:[%s1 + $0x98] sm:$0xff]
    %v46 = vld [vmem:[%s1 + $0xa0] sm:$0xff]
    %v47 = vld [vmem:[%s1 + $0xa8] sm:$0xff]
    %v48 = vld [vmem:[%s1 + $0xb0] sm:$0xff]
    %v49 = vld [vmem:[%s1 + $0xb8] sm:$0xff]
    %v50 = vld [vmem:[%s1 + $0xc0] sm:$0xff]
    %v51 = vld [vmem:[%s1 + $0xc8] sm:$0xff]
    %v52 = vld [vmem:[%s1 + $0xd0] sm:$0xff]
    %v53 = vld [vmem:[%s1 + $0xd8] sm:$0xff]
    %v54 = vld [vmem:[%s1 + $0xe0] sm:$0xff]
    %v55 = vld [vmem:[%s1 + $0xe8] sm:$0xff]
    %v56 = vld [vmem:[%s1 + $0xf0] sm:$0xff]
    %v57 = vld [vmem:[%s1 + $0xf8] sm:$0xff]
    %v58 = vld [vmem:[%s2] sm:$0x3]
    %v60 = vlaneseq
    %v61 = vshrl.u32 %v60, 7
    %v62 = vsub.s32 0, %v61
    %v63 = vrot.slane %v58, %v62
    %v64 = vlaneseq
    %v65 = vshrl.u32 %v64, 7
    %v66 = vsub.s32 1, %v65
    %v67 = vrot.slane %v58, %v66
    %v72 = vunpack.c.l.s4 1966171168
    %v73 = vunpack.c.0.s8 %v72
    %v74 = vlaneseq
    %v75 = vshrl.u32 %v74, 7
    %v76 = vsub.s32 %v73, %v75
    %v77 = vrot.slane %v25, %v76
    %v78 = vcombine.high %v77, %v77
    %v80 = vunpack.c.l.s4 1966171168
    %v81 = vunpack.c.0.s8 %v80
    %v82 = vlaneseq
    %v83 = vshrl.u32 %v82, 7
    %v84 = vsub.s32 %v81, %v83
    %v85 = vrot.slane %v77, %v84
    %v87 = vunpack.c.l.s4 1966171168
    %v88 = vunpack.c.0.s8 %v87
    %v89 = vlaneseq
    %v90 = vshrl.u32 %v89, 7
    %v91 = vsub.s32 %v88, %v90
    %v92 = vrot.slane %v78, %v91
    %v127 = vunpack.c.l.b16 %v26
    %v128 = vunpack.c.h.b16 %v26
    %v129 = vunpack.c.l.b16 %v27
    %v130 = vunpack.c.h.b16 %v27
    %v131 = vunpack.c.l.b16 %v28
    %v132 = vunpack.c.h.b16 %v28
    %v133 = vunpack.c.l.b16 %v29
    %v134 = vunpack.c.h.b16 %v29
    %v135 = vunpack.c.l.b16 %v30
    %v136 = vunpack.c.h.b16 %v30
    %v137 = vunpack.c.l.b16 %v31
    %v138 = vunpack.c.h.b16 %v31
    %v139 = vunpack.c.l.b16 %v32
    %v140 = vunpack.c.h.b16 %v32
    %v141 = vunpack.c.l.b16 %v33
    %v142 = vunpack.c.h.b16 %v33
    %v143 = vunpack.c.l.b16 %v34
    %v144 = vunpack.c.h.b16 %v34
    %v145 = vunpack.c.l.b16 %v35
    %v146 = vunpack.c.h.b16 %v35
    %v147 = vunpack.c.l.b16 %v36
    %v148 = vunpack.c.h.b16 %v36
    %v149 = vunpack.c.l.b16 %v37
    %v150 = vunpack.c.h.b16 %v37
    %v151 = vunpack.c.l.b16 %v38
    %v152 = vunpack.c.h.b16 %v38
    %v153 = vunpack.c.l.b16 %v39
    %v154 = vunpack.c.h.b16 %v39
    %v155 = vunpack.c.l.b16 %v40
    %v156 = vunpack.c.h.b16 %v40
    %v157 = vunpack.c.l.b16 %v41
    %v158 = vunpack.c.h.b16 %v41
    %v159 = vunpack.c.l.b16 %v42
    %v160 = vunpack.c.h.b16 %v42
    %v161 = vunpack.c.l.b16 %v43
    %v162 = vunpack.c.h.b16 %v43
    %v163 = vunpack.c.l.b16 %v44
    %v164 = vunpack.c.h.b16 %v44
    %v165 = vunpack.c.l.b16 %v45
    %v166 = vunpack.c.h.b16 %v45
    %v167 = vunpack.c.l.b16 %v46
    %v168 = vunpack.c.h.b16 %v46
    %v169 = vunpack.c.l.b16 %v47
    %v170 = vunpack.c.h.b16 %v47
    %v171 = vunpack.c.l.b16 %v48
    %v172 = vunpack.c.h.b16 %v48
    %v173 = vunpack.c.l.b16 %v49
    %v174 = vunpack.c.h.b16 %v49
    %v175 = vunpack.c.l.b16 %v50
    %v176 = vunpack.c.h.b16 %v50
    %v177 = vunpack.c.l.b16 %v51
    %v178 = vunpack.c.h.b16 %v51
    %v179 = vunpack.c.l.b16 %v52
    %v180 = vunpack.c.h.b16 %v52
    %v181 = vunpack.c.l.b16 %v53
    %v182 = vunpack.c.h.b16 %v53
    %v183 = vunpack.c.l.b16 %v54
    %v184 = vunpack.c.h.b16 %v54
    %v185 = vunpack.c.l.b16 %v55
    %v186 = vunpack.c.h.b16 %v55
    %v187 = vunpack.c.l.b16 %v56
    %v188 = vunpack.c.h.b16 %v56
    %v189 = vunpack.c.l.b16 %v57
    %v190 = vunpack.c.h.b16 %v57
    %v191 = vpack.c.b16 %v129, %v127
    %v192 = vpack.c.b16 %v130, %v128
    %v193 = vpack.c.b16 %v133, %v131
    %v194 = vpack.c.b16 %v134, %v132
    %v195 = vpack.c.b16 %v137, %v135
    %v196 = vpack.c.b16 %v138, %v136
    %v197 = vpack.c.b16 %v141, %v139
    %v198 = vpack.c.b16 %v142, %v140
    %v199 = vpack.c.b16 %v145, %v143
    %v200 = vpack.c.b16 %v146, %v144
    %v201 = vpack.c.b16 %v149, %v147
    %v202 = vpack.c.b16 %v150, %v148
    %v203 = vpack.c.b16 %v153, %v151
    %v204 = vpack.c.b16 %v154, %v152
    %v205 = vpack.c.b16 %v157, %v155
    %v206 = vpack.c.b16 %v158, %v156
    %v207 = vpack.c.b16 %v161, %v159
    %v208 = vpack.c.b16 %v162, %v160
    %v209 = vpack.c.b16 %v165, %v163
    %v210 = vpack.c.b16 %v166, %v164
    %v211 = vpack.c.b16 %v169, %v167
    %v212 = vpack.c.b16 %v170, %v168
    %v213 = vpack.c.b16 %v173, %v171
    %v214 = vpack.c.b16 %v174, %v172
    %v215 = vpack.c.b16 %v177, %v175
    %v216 = vpack.c.b16 %v178, %v176
    %v217 = vpack.c.b16 %v181, %v179
    %v218 = vpack.c.b16 %v182, %v180
    %v219 = vpack.c.b16 %v185, %v183
    %v220 = vpack.c.b16 %v186, %v184
    %v221 = vpack.c.b16 %v189, %v187
    %v222 = vpack.c.b16 %v190, %v188
    %255 = vmatprep.subr.bf16.mxu0 %v192
    %256 = vmatpush1.bf16.msra.mxu0 %v191
    %257 = vmatprep.subr.bf16.mxu0 %v194
    %258 = vmatpush1.bf16.msra.mxu0 %v193
    %259 = vmatprep.subr.bf16.mxu0 %v196
    %260 = vmatpush1.bf16.msra.mxu0 %v195
    %261 = vmatprep.subr.bf16.mxu0 %v198
    %262 = vmatpush1.bf16.msra.mxu0 %v197
    %263 = vmatprep.subr.bf16.mxu0 %v200
    %264 = vmatpush1.bf16.msra.mxu0 %v199
    %265 = vmatprep.subr.bf16.mxu0 %v202
    %266 = vmatpush1.bf16.msra.mxu0 %v201
    %267 = vmatprep.subr.bf16.mxu0 %v204
    %268 = vmatpush1.bf16.msra.mxu0 %v203
    %269 = vmatprep.subr.bf16.mxu0 %v206
    %270 = vmatpush1.bf16.msra.mxu0 %v205
    %271 = vmatprep.subr.bf16.mxu0 %v208
    %272 = vmatpush1.bf16.msra.mxu0 %v207
    %273 = vmatprep.subr.bf16.mxu0 %v210
    %274 = vmatpush1.bf16.msra.mxu0 %v209
    %275 = vmatprep.subr.bf16.mxu0 %v212
    %276 = vmatpush1.bf16.msra.mxu0 %v211
    %277 = vmatprep.subr.bf16.mxu0 %v214
    %278 = vmatpush1.bf16.msra.mxu0 %v213
    %279 = vmatprep.subr.bf16.mxu0 %v216
    %280 = vmatpush1.bf16.msra.mxu0 %v215
    %281 = vmatprep.subr.bf16.mxu0 %v218
    %282 = vmatpush1.bf16.msra.mxu0 %v217
    %283 = vmatprep.subr.bf16.mxu0 %v220
    %284 = vmatpush1.bf16.msra.mxu0 %v219
    %285 = vmatprep.subr.bf16.mxu0 %v222
    %286 = vmatpush1.bf16.msra.mxu0 %v221
    %287 = vmatprep.mubr.bf16.mxu0 %v92
    %288 = vmatmul.mubr.bf16.gmra.mrb[0].mxu0 %v85
    %v289 = vpop.f32.mrb[0].mxu0
    %v290 = vadd.f32 %v63, %v289
    %v291 = vpop.f32.mrb[0].mxu0
    %v292 = vadd.f32 %v67, %v291
    %v293 = vpop.f32.mrb[0].mxu0
    %v294 = vpop.f32.mrb[0].mxu0
    %295 = vdwg.mxu0
    %v296 = vmax.f32 %v290, 0.0
    %v297 = vmax.f32 %v292, 0.0
    %v298 = vpack.c.bf16 %v296, %v296
    %v299 = vpack.c.bf16 %v297, %v297
    %v300 = vld [vmem:[%s3] sm:$0xf]
    %v301 = vld [vmem:[%s3 + $0x4] sm:$0xf]
    %v302 = vld [vmem:[%s3 + $0x8] sm:$0xf]
    %v303 = vld [vmem:[%s3 + $0xc] sm:$0xf]
    %v304 = vld [vmem:[%s3 + $0x10] sm:$0xf]
    %v305 = vld [vmem:[%s3 + $0x14] sm:$0xf]
    %v306 = vld [vmem:[%s3 + $0x18] sm:$0xf]
    %v307 = vld [vmem:[%s3 + $0x1c] sm:$0xf]
    %v308 = vld [vmem:[%s3 + $0x20] sm:$0xf]
    %v309 = vld [vmem:[%s3 + $0x24] sm:$0xf]
    %v310 = vld [vmem:[%s3 + $0x28] sm:$0xf]
    %v311 = vld [vmem:[%s3 + $0x2c] sm:$0xf]
    %v312 = vld [vmem:[%s3 + $0x30] sm:$0xf]
    %v313 = vld [vmem:[%s3 + $0x34] sm:$0xf]
    %v314 = vld [vmem:[%s3 + $0x38] sm:$0xf]
    %v315 = vld [vmem:[%s3 + $0x3c] sm:$0xf]
    %v316 = vld [vmem:[%s3 + $0x40] sm:$0xf]
    %v317 = vld [vmem:[%s3 + $0x44] sm:$0xf]
    %v318 = vld [vmem:[%s3 + $0x48] sm:$0xf]
    %v319 = vld [vmem:[%s3 + $0x4c] sm:$0xf]
    %v320 = vld [vmem:[%s3 + $0x50] sm:$0xf]
    %v321 = vld [vmem:[%s3 + $0x54] sm:$0xf]
    %v322 = vld [vmem:[%s3 + $0x58] sm:$0xf]
    %v323 = vld [vmem:[%s3 + $0x5c] sm:$0xf]
    %v324 = vld [vmem:[%s3 + $0x60] sm:$0xf]
    %v325 = vld [vmem:[%s3 + $0x64] sm:$0xf]
    %v326 = vld [vmem:[%s3 + $0x68] sm:$0xf]
    %v327 = vld [vmem:[%s3 + $0x6c] sm:$0xf]
    %v328 = vld [vmem:[%s3 + $0x70] sm:$0xf]
    %v329 = vld [vmem:[%s3 + $0x74] sm:$0xf]
    %v330 = vld [vmem:[%s3 + $0x78] sm:$0xf]
    %v331 = vld [vmem:[%s3 + $0x7c] sm:$0xf]
    %v332 = vld [vmem:[%s4] sm:$0x1]
    %v334 = vlaneseq
    %v335 = vshrl.u32 %v334, 7
    %v336 = vsub.s32 0, %v335
    %v337 = vrot.slane %v332, %v336
    %v371 = vunpack.c.l.b16 %v300
    %v372 = vunpack.c.l.b16 %v301
    %v373 = vunpack.c.l.b16 %v302
    %v374 = vunpack.c.l.b16 %v303
    %v375 = vunpack.c.l.b16 %v304
    %v376 = vunpack.c.l.b16 %v305
    %v377 = vunpack.c.l.b16 %v306
    %v378 = vunpack.c.l.b16 %v307
    %v379 = vunpack.c.l.b16 %v308
    %v380 = vunpack.c.l.b16 %v309
    %v381 = vunpack.c.l.b16 %v310
    %v382 = vunpack.c.l.b16 %v311
    %v383 = vunpack.c.l.b16 %v312
    %v384 = vunpack.c.l.b16 %v313
    %v385 = vunpack.c.l.b16 %v314
    %v386 = vunpack.c.l.b16 %v315
    %v387 = vunpack.c.l.b16 %v316
    %v388 = vunpack.c.l.b16 %v317
    %v389 = vunpack.c.l.b16 %v318
    %v390 = vunpack.c.l.b16 %v319
    %v391 = vunpack.c.l.b16 %v320
    %v392 = vunpack.c.l.b16 %v321
    %v393 = vunpack.c.l.b16 %v322
    %v394 = vunpack.c.l.b16 %v323
    %v395 = vunpack.c.l.b16 %v324
    %v396 = vunpack.c.l.b16 %v325
    %v397 = vunpack.c.l.b16 %v326
    %v398 = vunpack.c.l.b16 %v327
    %v399 = vunpack.c.l.b16 %v328
    %v400 = vunpack.c.l.b16 %v329
    %v401 = vunpack.c.l.b16 %v330
    %v402 = vunpack.c.l.b16 %v331
    %v403 = vpack.c.b16 %v372, %v371
    %v404 = vpack.c.b16 %v374, %v373
    %v405 = vpack.c.b16 %v376, %v375
    %v406 = vpack.c.b16 %v378, %v377
    %v407 = vpack.c.b16 %v380, %v379
    %v408 = vpack.c.b16 %v382, %v381
    %v409 = vpack.c.b16 %v384, %v383
    %v410 = vpack.c.b16 %v386, %v385
    %v411 = vpack.c.b16 %v388, %v387
    %v412 = vpack.c.b16 %v390, %v389
    %v413 = vpack.c.b16 %v392, %v391
    %v414 = vpack.c.b16 %v394, %v393
    %v415 = vpack.c.b16 %v396, %v395
    %v416 = vpack.c.b16 %v398, %v397
    %v417 = vpack.c.b16 %v400, %v399
    %v418 = vpack.c.b16 %v402, %v401
    %435 = vmatprep.subr.bf16.mxu0 0
    %436 = vmatpush1.bf16.msra.mxu0 %v403
    %437 = vmatprep.subr.bf16.mxu0 0
    %438 = vmatpush1.bf16.msra.mxu0 %v404
    %439 = vmatprep.subr.bf16.mxu0 0
    %440 = vmatpush1.bf16.msra.mxu0 %v405
    %441 = vmatprep.subr.bf16.mxu0 0
    %442 = vmatpush1.bf16.msra.mxu0 %v406
    %443 = vmatprep.subr.bf16.mxu0 0
    %444 = vmatpush1.bf16.msra.mxu0 %v407
    %445 = vmatprep.subr.bf16.mxu0 0
    %446 = vmatpush1.bf16.msra.mxu0 %v408
    %447 = vmatprep.subr.bf16.mxu0 0
    %448 = vmatpush1.bf16.msra.mxu0 %v409
    %449 = vmatprep.subr.bf16.mxu0 0
    %450 = vmatpush1.bf16.msra.mxu0 %v410
    %451 = vmatprep.subr.bf16.mxu0 0
    %452 = vmatpush1.bf16.msra.mxu0 %v411
    %453 = vmatprep.subr.bf16.mxu0 0
    %454 = vmatpush1.bf16.msra.mxu0 %v412
    %455 = vmatprep.subr.bf16.mxu0 0
    %456 = vmatpush1.bf16.msra.mxu0 %v413
    %457 = vmatprep.subr.bf16.mxu0 0
    %458 = vmatpush1.bf16.msra.mxu0 %v414
    %459 = vmatprep.subr.bf16.mxu0 0
    %460 = vmatpush1.bf16.msra.mxu0 %v415
    %461 = vmatprep.subr.bf16.mxu0 0
    %462 = vmatpush1.bf16.msra.mxu0 %v416
    %463 = vmatprep.subr.bf16.mxu0 0
    %464 = vmatpush1.bf16.msra.mxu0 %v417
    %465 = vmatprep.subr.bf16.mxu0 0
    %466 = vmatpush1.bf16.msra.mxu0 %v418
    %467 = vmatprep.mubr.bf16.mxu0 %v299
    %468 = vmatmul.mubr.bf16.gmra.mrb[0].mxu0 %v298
    %v469 = vpop.f32.mrb[0].mxu0
    %v470 = vadd.f32 %v337, %v469
    %v471 = vpop.f32.mrb[0].mxu0
    %v472 = vpop.f32.mrb[0].mxu0
    %v473 = vpop.f32.mrb[0].mxu0
    %474 = vdwg.mxu0
    %476 = vrot.lane.b32.xlu0 %v470, 124
    %v477 = vpop.permute.xlu0 %476
    %v479 = vmin.f32 %v470, %v477
    %480 = vrot.lane.b32.xlu0 %v470, 116
    %v481 = vpop.permute.xlu0 %480
    %v483 = vmin.f32 %v470, %v481
    %484 = vrot.lane.b32.xlu0 %v470, 120
    %v485 = vpop.permute.xlu0 %484
    %v487 = vmin.f32 %v470, %v485
    %v488 = vmin.f32 %v479, %v481
    %489 = vrot.lane.b32.xlu0 %v470, 12
    %v490 = vpop.permute.xlu0 %489
    %493 = vrot.lane.b32.xlu0 %v479, 20
    %v494 = vpop.permute.xlu0 %493
    %496 = vrot.lane.b32.xlu0 %v470, 20
    %v497 = vpop.permute.xlu0 %496
    %499 = vrot.lane.b32.xlu0 %v479, 28
    %v500 = vpop.permute.xlu0 %499
    %502 = vrot.lane.b32.xlu0 %v470, 40
    %v503 = vpop.permute.xlu0 %502
    %505 = vrot.lane.b32.xlu0 %v470, 36
    %v506 = vpop.permute.xlu0 %505
    %508 = vrot.lane.b32.xlu0 %v479, 52
    %v509 = vpop.permute.xlu0 %508
    %512 = vrot.lane.b32.xlu0 %v483, 56
    %v513 = vpop.permute.xlu0 %512
    %516 = vrot.lane.b32.xlu0 %v487, 56
    %v517 = vpop.permute.xlu0 %516
    %520 = vrot.lane.b32.xlu0 %v488, 64
    %v521 = vpop.permute.xlu0 %520
    %523 = vrot.lane.b32.xlu0 %v470, 68
    %v524 = vpop.permute.xlu0 %523
    %526 = vrot.lane.b32.xlu0 %v470, 64
    %v527 = vpop.permute.xlu0 %526
    %vm529 = vcmask 130048
    %v530 = vsel %vm529, %v470, %v490
    %vm531 = vcmask 162816
    %v532 = vsel %vm531, %v530, %v490
    %vm533 = vcmask 195584
    %v534 = vsel %vm533, %v532, %v494
    %vm535 = vcmask 228352
    %v536 = vsel %vm535, %v534, %v497
    %vm537 = vcmask 261120
    %v538 = vsel %vm537, %v536, %v497
    %vm539 = vcmask 293888
    %v540 = vsel %vm539, %v538, %v500
    %vm541 = vcmask 326656
    %v542 = vsel %vm541, %v540, %v503
    %vm543 = vcmask 359424
    %v544 = vsel %vm543, %v542, %v503
    %vm545 = vcmask 392192
    %v546 = vsel %vm545, %v544, %v506
    %vm547 = vcmask 424960
    %v548 = vsel %vm547, %v546, %v509
    %vm549 = vcmask 457728
    %v550 = vsel %vm549, %v548, %v513
    %vm551 = vcmask 490496
    %v552 = vsel %vm551, %v550, %v517
    %vm553 = vcmask 523264
    %v554 = vsel %vm553, %v552, %v521
    %vm555 = vcmask 556032
    %v556 = vsel %vm555, %v554, %v524
    %vm557 = vcmask 588800
    %v558 = vsel %vm557, %v556, %v527
    %559 = vrot.lane.b32.xlu0 %v487, 76
    %v560 = vpop.permute.xlu0 %559
    %vm562 = vcmask 621568
    %v563 = vsel %vm562, %v558, %v560
    %v564 = vld [vmem:[%s5] sm:$0xff]
    %v565 = vld [vmem:[%s5 + $0x8] sm:$0xff]
    %v566 = vld [vmem:[%s5 + $0x10] sm:$0xff]
    %v567 = vld [vmem:[%s5 + $0x18] sm:$0xff]
    %v568 = vld [vmem:[%s5 + $0x20] sm:$0xff]
    %v569 = vld [vmem:[%s5 + $0x28] sm:$0xff]
    %v570 = vld [vmem:[%s5 + $0x30] sm:$0xff]
    %v571 = vld [vmem:[%s5 + $0x38] sm:$0xff]
    %v572 = vld [vmem:[%s5 + $0x40] sm:$0xff]
    %v573 = vld [vmem:[%s5 + $0x48] sm:$0xff]
    %vm574 = vcmask 654336
    %v576 = vsel %vm574, %v563, 0
    %578 = vmatprep.subr.mxu0 0.0
    %579 = vmatpush1.msra.mxu0 %v564
    %580 = vmatprep.subr.mxu0 0.0
    %581 = vmatpush1.msra.mxu0 %v565
    %582 = vmatprep.subr.mxu0 0.0
    %583 = vmatpush1.msra.mxu0 %v566
    %584 = vmatprep.subr.mxu0 0.0
    %585 = vmatpush1.msra.mxu0 %v567
    %586 = vmatprep.subr.mxu0 0.0
    %587 = vmatpush1.msra.mxu0 %v568
    %588 = vmatprep.subr.mxu0 0.0
    %589 = vmatpush1.msra.mxu0 %v569
    %590 = vmatprep.subr.mxu0 0.0
    %591 = vmatpush1.msra.mxu0 %v570
    %592 = vmatprep.subr.mxu0 0.0
    %593 = vmatpush1.msra.mxu0 %v571
    %594 = vmatprep.subr.mxu0 0.0
    %595 = vmatpush1.msra.mxu0 %v572
    %596 = vmatprep.subr.mxu0 0.0
    %597 = vmatpush1.msra.mxu0 %v573
    %598 = vmatprep.subr.mxu0 0.0
    %599 = vmatpush1.msra.mxu0 0.0
    %600 = vmatprep.subr.mxu0 0.0
    %601 = vmatpush1.msra.mxu0 0.0
    %602 = vmatprep.subr.mxu0 0.0
    %603 = vmatpush1.msra.mxu0 0.0
    %604 = vmatprep.subr.mxu0 0.0
    %605 = vmatpush1.msra.mxu0 0.0
    %606 = vmatprep.subr.mxu0 0.0
    %607 = vmatpush1.msra.mxu0 0.0
    %608 = vmatprep.subr.mxu0 0.0
    %609 = vmatpush1.msra.mxu0 0.0
    %610 = vmatprep.subr.mxu0 0.0
    %611 = vmatpush1.msra.mxu0 0.0
    %612 = vmatprep.subr.mxu0 0.0
    %613 = vmatpush1.msra.mxu0 0.0
    %614 = vmatprep.subr.mxu0 0.0
    %615 = vmatpush1.msra.mxu0 0.0
    %616 = vmatprep.subr.mxu0 0.0
    %617 = vmatpush1.msra.mxu0 0.0
    %618 = vmatprep.subr.mxu0 0.0
    %619 = vmatpush1.msra.mxu0 0.0
    %620 = vmatprep.subr.mxu0 0.0
    %621 = vmatpush1.msra.mxu0 0.0
    %622 = vmatprep.subr.mxu0 0.0
    %623 = vmatpush1.msra.mxu0 0.0
    %624 = vmatprep.subr.mxu0 0.0
    %625 = vmatpush1.msra.mxu0 0.0
    %626 = vmatprep.subr.mxu0 0.0
    %627 = vmatpush1.msra.mxu0 0.0
    %628 = vmatprep.subr.mxu0 0.0
    %629 = vmatpush1.msra.mxu0 0.0
    %630 = vmatprep.subr.mxu0 0.0
    %631 = vmatpush1.msra.mxu0 0.0
    %632 = vmatprep.subr.mxu0 0.0
    %633 = vmatpush1.msra.mxu0 0.0
    %634 = vmatprep.subr.mxu0 0.0
    %635 = vmatpush1.msra.mxu0 0.0
    %636 = vmatprep.subr.mxu0 0.0
    %637 = vmatpush1.msra.mxu0 0.0
    %638 = vmatprep.subr.mxu0 0.0
    %639 = vmatpush1.msra.mxu0 0.0
    %640 = vmatprep.subr.mxu0 0.0
    %641 = vmatpush1.msra.mxu0 0.0
    %642 = vmatprep.mubr.f32.mxu0 0.0
    %643 = vmatmul.mubr.f32.gmra.mrb[0].mxu0 %v576
    %v644 = vpop.f32.mrb[0].mxu0
    %v645 = vadd.f32 0.0, %v644
    %v646 = vpop.f32.mrb[0].mxu0
    %647 = vdwg.mxu0
    %vm648 = vcmask 25600
    %649 = vst.msk [vmem:[#allocation2] sm:$0x3] %vm648, %v645
    // Predicated region
    $region26: #{forward.1} parent=1 // pred_check
      _
    $region27: #{forward.1} parent=1 // pred_check_branch
      %651 = sbr.rel (0) target = $region29
    $region28: #{forward.1} parent=1 // pred_region
      %s653 = ssub.s32 32, 32
      %654 = vsyncadd [#allocation3], %s653
      %s656 = sshll.u32 [#allocation2], 4
      %s657 = int_to_ptr.vmem [resolvable:$true] %s656
      %659 = dma.vmem_to_hbm [thread:$0]  %s657, 32, %s6, [#allocation3]
    $region29: #{forward.1} parent=1 // pred_fallthru
      _
    // Predicated region
    $region30: #{forward.1} parent=1 // pred_check
      _
    $region31: #{forward.1} parent=1 // pred_check_branch
      %661 = sbr.rel (0) target = $region33
    $region32: #{forward.1} parent=1 // pred_region
      %662 = dma.done [#allocation3], 32
    $region33: #{forward.1} parent=1 // pred_fallthru
      _
    %663 = vsyncpa [#allocation3], 1

</llo_original>
